<compile_context>
chip_gen: v5e
topology: v5e:2x2
jax: 0.10.0
libtpu: 0.0.40
codegen_flags: <defaults>
</compile_context>

<pallas_src>
import functools

import jax
import jax.numpy as jnp
from jax.experimental import pallas as pl
from jax.experimental.pallas import tpu as pltpu


def _conv3x3_relu_kernel(x_ref, w_ref, b_ref, o_ref, *, H, W, Nb):
    """3x3 'same' conv + bias + ReLU for Nb fused images (NCHW, spatial flat).

    x_ref: (Nb, Cin, H*W)   input block, one batch tile
    w_ref: (Cout, 9*Cin)    weight slab, column index = (kh*3 + kw)*Cin + ci
    b_ref: (Cout, 1)        bias
    o_ref: (Nb, Cout, H*W)  output block
    """
    Cin = x_ref.shape[1]
    HW = x_ref.shape[2]
    L = Nb * HW

    # Lane-concatenate the Nb images into one (Cin, Nb*HW) slab.  HW is a
    # multiple of 128, so this concat is layout-free (pure lane placement).
    if Nb == 1:
        x = x_ref[0]
    else:
        x = jnp.concatenate([x_ref[i] for i in range(Nb)], axis=1)

    # Border predicates from a single (1, L) iota (identical for every
    # channel; broadcast inside jnp.where).  Per-image flat position is
    # pos mod HW; cheap bitwise AND when HW / W are powers of two.
    pos = jax.lax.broadcasted_iota(jnp.int32, (1, L), 1)
    if (HW & (HW - 1)) == 0:
        p = jnp.bitwise_and(pos, HW - 1)
    else:
        p = jax.lax.rem(pos, jnp.int32(HW))
    if (W & (W - 1)) == 0:
        col = jnp.bitwise_and(p, W - 1)
    else:
        col = jax.lax.rem(p, jnp.int32(W))
    row_ok = {-1: p >= W, 0: None, 1: p < (H - 1) * W}
    col_ok = {-1: col > 0, 0: None, 1: col < (W - 1)}

    # Accumulate 9 small MXU dots (one per tap) instead of materializing a
    # (9*Cin, L) im2col slab: avoids the sublane-packing relayout the concat
    # forces at Cin < 8, and keeps the VMEM working set ~1x the input tile.
    # Halo is handled entirely in-register: rolls wrap across image / slab
    # boundaries only at positions that the row/col predicates zero out.
    acc = None
    tap = 0
    for dh in (-1, 0, 1):
        for dw in (-1, 0, 1):
            s = dh * W + dw                              # flat source offset
            shifted = x if s == 0 else pltpu.roll(x, shift=(-s) % L, axis=1)
            mask = row_ok[dh]
            if col_ok[dw] is not None:
                mask = col_ok[dw] if mask is None else (mask & col_ok[dw])
            if mask is not None:
                shifted = jnp.where(mask, shifted, 0.0)
            part = jnp.dot(w_ref[:, tap * Cin:(tap + 1) * Cin], shifted,
                           preferred_element_type=jnp.float32)
            acc = part if acc is None else acc + part
            tap += 1

    out = jnp.maximum(acc + b_ref[...], 0.0).astype(o_ref.dtype)
    # Per-image, lane-aligned static slices back into the output block.
    for i in range(Nb):
        o_ref[i] = out[:, i * HW:(i + 1) * HW]


def _pick_batch_tile(N, HW, lane_budget=2048):
    """Number of images fused per grid step.

    Fuse as many images as fit a ~2048-lane slab so the fixed per-grid-step
    cost is amortized, but (a) only when HW is a multiple of 128 so the
    in-kernel lane concat is layout-free, and (b) keep >= 2 grid steps when
    the batch allows it (N >= 4) so both v7x TensorCores get work.
    """
    if HW % 128 != 0:
        return 1
    cap = max(1, lane_budget // HW)
    if N >= 4:
        cap = min(cap, N // 2)
    nb = max(1, min(N, cap))
    while N % nb != 0:
        nb -= 1
    return nb


@jax.jit
def res_forward(x_nchw, weight_oihw, bias):
    """x_nchw: (N, C, H, W); weight_oihw: (C, C, 3, 3) (PyTorch OIHW); bias: (C,)."""
    N, C, H, W = x_nchw.shape
    HW = H * W
    Nb = _pick_batch_tile(N, HW)

    # Free contiguous reshape (no transpose, no HBM padding pass).
    x2 = x_nchw.reshape(N, C, HW)
    # Pre-pack weights once: (Cout, Cin, kh, kw) -> (Cout, (kh, kw, Cin)) slab.
    w_slab = jnp.transpose(weight_oihw, (0, 2, 3, 1)).reshape(C, 9 * C)
    b2 = bias.reshape(C, 1)

    itemsize = jnp.dtype(x_nchw.dtype).itemsize
    cost = pl.CostEstimate(
        flops=2 * N * C * 9 * C * HW,
        transcendentals=0,
        bytes_accessed=(2 * N * C * HW + 9 * C * C + C) * itemsize,
    )

    kernel = functools.partial(_conv3x3_relu_kernel, H=H, W=W, Nb=Nb)
    out2 = pl.pallas_call(
        kernel,
        out_shape=jax.ShapeDtypeStruct((N, C, HW), x_nchw.dtype),
        grid_spec=pltpu.PrefetchScalarGridSpec(
            num_scalar_prefetch=0,
            grid=(N // Nb,),
            in_specs=[
                pl.BlockSpec((Nb, C, HW), lambda n: (n, 0, 0)),
                pl.BlockSpec((C, 9 * C), lambda n: (0, 0)),   # resident weights
                pl.BlockSpec((C, 1), lambda n: (0, 0)),       # resident bias
            ],
            out_specs=pl.BlockSpec((Nb, C, HW), lambda n: (n, 0, 0)),
        ),
        compiler_params=pltpu.CompilerParams(
            dimension_semantics=("parallel",),
        ),
        cost_estimate=cost,
    )(x2, w_slab, b2)

    return out2.reshape(N, C, H, W)


def _reference(x_nchw, weight_oihw, bias):
    # Pure-JAX reference (lax conv) for correctness checking.
    out = jax.lax.conv_general_dilated(
        x_nchw,
        weight_oihw,
        window_strides=(1, 1),
        padding=((1, 1), (1, 1)),
        dimension_numbers=("NCHW", "OIHW", "NCHW"),
    )
    out = out + bias[None, :, None, None]
    return jnp.maximum(out, 0.0)


if __name__ == "__main__":
    # Small shapes consistent with the module: batch=2, channels=4, spatial=16.
    N, C, H, W = 2, 4, 16, 16

    key = jax.random.PRNGKey(0)
    kx, kw, kb = jax.random.split(key, 3)
    x = jax.random.normal(kx, (N, C, H, W), dtype=jnp.float32)
    # Parameters with nn.Conv2d(C, C, 3, 1, 1) shapes (PyTorch OIHW weight).
    weight = 0.1 * jax.random.normal(kw, (C, C, 3, 3), dtype=jnp.float32)
    bias = 0.1 * jax.random.normal(kb, (C,), dtype=jnp.float32)

    out = res_forward(x, weight, bias)
    out = jax.block_until_ready(out)

    ref = _reference(x, weight, bias)
    assert out.shape == (N, C, H, W)
    assert jnp.allclose(out, ref, atol=1e-5, rtol=1e-5)

    print("KERNEL_OK")
</pallas_src>

<mosaic_0001>
module attributes {stable_mosaic.version = 11 : i64} {
  func.func @_conv3x3_relu_kernel(%arg0: i32, %arg1: memref<2x4x256xf32, #tpu.memory_space<vmem>>, %arg2: memref<4x36xf32, #tpu.memory_space<vmem>>, %arg3: memref<4x1xf32, #tpu.memory_space<vmem>>, %arg4: memref<2x4x256xf32, #tpu.memory_space<vmem>>) attributes {dimension_semantics = [#tpu.dimension_semantics<parallel>], iteration_bounds = array<i64: 1>, scalar_prefetch = 0 : i64, scratch_operands = 0 : i64, tpu.core_type = #tpu.core_type<tc>, window_params = [{transform_indices = @transform_0, window_bounds = array<i64: 2, 4, 256>}, {pipeline_mode = #tpu.pipeline_mode<synchronous>, transform_indices = @transform_1, window_bounds = array<i64: 4, 36>}, {pipeline_mode = #tpu.pipeline_mode<synchronous>, transform_indices = @transform_2, window_bounds = array<i64: 4, 1>}, {transform_indices = @transform_3, window_bounds = array<i64: 2, 4, 256>}]} {
    %c0 = arith.constant 0 : index
    %c0_0 = arith.constant 0 : index
    %c0_1 = arith.constant 0 : index
    %0 = vector.load %arg1[%c0, %c0_0, %c0_1] : memref<2x4x256xf32, #tpu.memory_space<vmem>>, vector<1x4x256xf32>
    %1 = vector.shape_cast %0 : vector<1x4x256xf32> to vector<4x256xf32>
    %c1 = arith.constant 1 : index
    %c0_2 = arith.constant 0 : index
    %c0_3 = arith.constant 0 : index
    %2 = vector.load %arg1[%c1, %c0_2, %c0_3] : memref<2x4x256xf32, #tpu.memory_space<vmem>>, vector<1x4x256xf32>
    %3 = vector.shape_cast %2 : vector<1x4x256xf32> to vector<4x256xf32>
    %4 = tpu.concatenate %1, %3 in 1 : vector<4x256xf32>, vector<4x256xf32> -> vector<4x512xf32>
    %5 = tpu.iota {dimensions = array<i32: 1>} : vector<1x512xi32>
    %c255_i32 = arith.constant 255 : i32
    %6 = vector.broadcast %c255_i32 : i32 to vector<1x512xi32>
    %7 = arith.andi %5, %6 : vector<1x512xi32>
    %c15_i32 = arith.constant 15 : i32
    %8 = vector.broadcast %c15_i32 : i32 to vector<1x512xi32>
    %9 = arith.andi %7, %8 : vector<1x512xi32>
    %c16_i32 = arith.constant 16 : i32
    %10 = vector.broadcast %c16_i32 : i32 to vector<1x512xi32>
    %11 = arith.cmpi sge, %7, %10 : vector<1x512xi32>
    %c240_i32 = arith.constant 240 : i32
    %12 = vector.broadcast %c240_i32 : i32 to vector<1x512xi32>
    %13 = arith.cmpi slt, %7, %12 : vector<1x512xi32>
    %c0_i32 = arith.constant 0 : i32
    %14 = vector.broadcast %c0_i32 : i32 to vector<1x512xi32>
    %15 = arith.cmpi sgt, %9, %14 : vector<1x512xi32>
    %c15_i32_4 = arith.constant 15 : i32
    %16 = vector.broadcast %c15_i32_4 : i32 to vector<1x512xi32>
    %17 = arith.cmpi slt, %9, %16 : vector<1x512xi32>
    %c17_i32 = arith.constant 17 : i32
    %18 = tpu.dynamic_rotate %4 by %c17_i32 dim 1 : vector<4x512xf32>, i32 -> vector<4x512xf32>
    %19 = arith.andi %11, %15 : vector<1x512xi1>
    %cst = arith.constant 0.000000e+00 : f32
    %20 = vector.shape_cast %19 : vector<1x512xi1> to vector<1x512xi1>
    %21 = vector.broadcast %20 : vector<1x512xi1> to vector<4x512xi1>
    %22 = vector.broadcast %cst : f32 to vector<4x512xf32>
    %23 = arith.select %21, %18, %22 : vector<4x512xi1>, vector<4x512xf32>
    %c0_5 = arith.constant 0 : index
    %c0_6 = arith.constant 0 : index
    %24 = vector.load %arg2[%c0_5, %c0_6] : memref<4x36xf32, #tpu.memory_space<vmem>>, vector<4x4xf32>
    %cst_7 = arith.constant dense<0.000000e+00> : vector<4x512xf32>
    %25 = tpu.matmul %24, %23, %cst_7 {dimension_numbers = #tpu.dot_dimension_numbers<[1], [0], [0], [1], [0, 0, 1, 1], [], []>} : vector<4x4xf32>, vector<4x512xf32>, vector<4x512xf32> -> vector<4x512xf32>
    %c16_i32_8 = arith.constant 16 : i32
    %26 = tpu.dynamic_rotate %4 by %c16_i32_8 dim 1 : vector<4x512xf32>, i32 -> vector<4x512xf32>
    %cst_9 = arith.constant 0.000000e+00 : f32
    %27 = vector.shape_cast %11 : vector<1x512xi1> to vector<1x512xi1>
    %28 = vector.broadcast %27 : vector<1x512xi1> to vector<4x512xi1>
    %29 = vector.broadcast %cst_9 : f32 to vector<4x512xf32>
    %30 = arith.select %28, %26, %29 : vector<4x512xi1>, vector<4x512xf32>
    %c0_10 = arith.constant 0 : index
    %c4 = arith.constant 4 : index
    %31 = vector.load %arg2[%c0_10, %c4] : memref<4x36xf32, #tpu.memory_space<vmem>>, vector<4x4xf32>
    %cst_11 = arith.constant dense<0.000000e+00> : vector<4x512xf32>
    %32 = tpu.matmul %31, %30, %cst_11 {dimension_numbers = #tpu.dot_dimension_numbers<[1], [0], [0], [1], [0, 0, 1, 1], [], []>} : vector<4x4xf32>, vector<4x512xf32>, vector<4x512xf32> -> vector<4x512xf32>
    %33 = arith.addf %25, %32 : vector<4x512xf32>
    %c15_i32_12 = arith.constant 15 : i32
    %34 = tpu.dynamic_rotate %4 by %c15_i32_12 dim 1 : vector<4x512xf32>, i32 -> vector<4x512xf32>
    %35 = arith.andi %11, %17 : vector<1x512xi1>
    %cst_13 = arith.constant 0.000000e+00 : f32
    %36 = vector.shape_cast %35 : vector<1x512xi1> to vector<1x512xi1>
    %37 = vector.broadcast %36 : vector<1x512xi1> to vector<4x512xi1>
    %38 = vector.broadcast %cst_13 : f32 to vector<4x512xf32>
    %39 = arith.select %37, %34, %38 : vector<4x512xi1>, vector<4x512xf32>
    %c0_14 = arith.constant 0 : index
    %c8 = arith.constant 8 : index
    %40 = vector.load %arg2[%c0_14, %c8] : memref<4x36xf32, #tpu.memory_space<vmem>>, vector<4x4xf32>
    %cst_15 = arith.constant dense<0.000000e+00> : vector<4x512xf32>
    %41 = tpu.matmul %40, %39, %cst_15 {dimension_numbers = #tpu.dot_dimension_numbers<[1], [0], [0], [1], [0, 0, 1, 1], [], []>} : vector<4x4xf32>, vector<4x512xf32>, vector<4x512xf32> -> vector<4x512xf32>
    %42 = arith.addf %33, %41 : vector<4x512xf32>
    %c1_i32 = arith.constant 1 : i32
    %43 = tpu.dynamic_rotate %4 by %c1_i32 dim 1 : vector<4x512xf32>, i32 -> vector<4x512xf32>
    %cst_16 = arith.constant 0.000000e+00 : f32
    %44 = vector.shape_cast %15 : vector<1x512xi1> to vector<1x512xi1>
    %45 = vector.broadcast %44 : vector<1x512xi1> to vector<4x512xi1>
    %46 = vector.broadcast %cst_16 : f32 to vector<4x512xf32>
    %47 = arith.select %45, %43, %46 : vector<4x512xi1>, vector<4x512xf32>
    %c0_17 = arith.constant 0 : index
    %c12 = arith.constant 12 : index
    %48 = vector.load %arg2[%c0_17, %c12] : memref<4x36xf32, #tpu.memory_space<vmem>>, vector<4x4xf32>
    %cst_18 = arith.constant dense<0.000000e+00> : vector<4x512xf32>
    %49 = tpu.matmul %48, %47, %cst_18 {dimension_numbers = #tpu.dot_dimension_numbers<[1], [0], [0], [1], [0, 0, 1, 1], [], []>} : vector<4x4xf32>, vector<4x512xf32>, vector<4x512xf32> -> vector<4x512xf32>
    %50 = arith.addf %42, %49 : vector<4x512xf32>
    %c0_19 = arith.constant 0 : index
    %c16 = arith.constant 16 : index
    %51 = vector.load %arg2[%c0_19, %c16] : memref<4x36xf32, #tpu.memory_space<vmem>>, vector<4x4xf32>
    %cst_20 = arith.constant dense<0.000000e+00> : vector<4x512xf32>
    %52 = tpu.matmul %51, %4, %cst_20 {dimension_numbers = #tpu.dot_dimension_numbers<[1], [0], [0], [1], [0, 0, 1, 1], [], []>} : vector<4x4xf32>, vector<4x512xf32>, vector<4x512xf32> -> vector<4x512xf32>
    %53 = arith.addf %50, %52 : vector<4x512xf32>
    %c511_i32 = arith.constant 511 : i32
    %54 = tpu.dynamic_rotate %4 by %c511_i32 dim 1 : vector<4x512xf32>, i32 -> vector<4x512xf32>
    %cst_21 = arith.constant 0.000000e+00 : f32
    %55 = vector.shape_cast %17 : vector<1x512xi1> to vector<1x512xi1>
    %56 = vector.broadcast %55 : vector<1x512xi1> to vector<4x512xi1>
    %57 = vector.broadcast %cst_21 : f32 to vector<4x512xf32>
    %58 = arith.select %56, %54, %57 : vector<4x512xi1>, vector<4x512xf32>
    %c0_22 = arith.constant 0 : index
    %c20 = arith.constant 20 : index
    %59 = vector.load %arg2[%c0_22, %c20] : memref<4x36xf32, #tpu.memory_space<vmem>>, vector<4x4xf32>
    %cst_23 = arith.constant dense<0.000000e+00> : vector<4x512xf32>
    %60 = tpu.matmul %59, %58, %cst_23 {dimension_numbers = #tpu.dot_dimension_numbers<[1], [0], [0], [1], [0, 0, 1, 1], [], []>} : vector<4x4xf32>, vector<4x512xf32>, vector<4x512xf32> -> vector<4x512xf32>
    %61 = arith.addf %53, %60 : vector<4x512xf32>
    %c497_i32 = arith.constant 497 : i32
    %62 = tpu.dynamic_rotate %4 by %c497_i32 dim 1 : vector<4x512xf32>, i32 -> vector<4x512xf32>
    %63 = arith.andi %13, %15 : vector<1x512xi1>
    %cst_24 = arith.constant 0.000000e+00 : f32
    %64 = vector.shape_cast %63 : vector<1x512xi1> to vector<1x512xi1>
    %65 = vector.broadcast %64 : vector<1x512xi1> to vector<4x512xi1>
    %66 = vector.broadcast %cst_24 : f32 to vector<4x512xf32>
    %67 = arith.select %65, %62, %66 : vector<4x512xi1>, vector<4x512xf32>
    %c0_25 = arith.constant 0 : index
    %c24 = arith.constant 24 : index
    %68 = vector.load %arg2[%c0_25, %c24] : memref<4x36xf32, #tpu.memory_space<vmem>>, vector<4x4xf32>
    %cst_26 = arith.constant dense<0.000000e+00> : vector<4x512xf32>
    %69 = tpu.matmul %68, %67, %cst_26 {dimension_numbers = #tpu.dot_dimension_numbers<[1], [0], [0], [1], [0, 0, 1, 1], [], []>} : vector<4x4xf32>, vector<4x512xf32>, vector<4x512xf32> -> vector<4x512xf32>
    %70 = arith.addf %61, %69 : vector<4x512xf32>
    %c496_i32 = arith.constant 496 : i32
    %71 = tpu.dynamic_rotate %4 by %c496_i32 dim 1 : vector<4x512xf32>, i32 -> vector<4x512xf32>
    %cst_27 = arith.constant 0.000000e+00 : f32
    %72 = vector.shape_cast %13 : vector<1x512xi1> to vector<1x512xi1>
    %73 = vector.broadcast %72 : vector<1x512xi1> to vector<4x512xi1>
    %74 = vector.broadcast %cst_27 : f32 to vector<4x512xf32>
    %75 = arith.select %73, %71, %74 : vector<4x512xi1>, vector<4x512xf32>
    %c0_28 = arith.constant 0 : index
    %c28 = arith.constant 28 : index
    %76 = vector.load %arg2[%c0_28, %c28] : memref<4x36xf32, #tpu.memory_space<vmem>>, vector<4x4xf32>
    %cst_29 = arith.constant dense<0.000000e+00> : vector<4x512xf32>
    %77 = tpu.matmul %76, %75, %cst_29 {dimension_numbers = #tpu.dot_dimension_numbers<[1], [0], [0], [1], [0, 0, 1, 1], [], []>} : vector<4x4xf32>, vector<4x512xf32>, vector<4x512xf32> -> vector<4x512xf32>
    %78 = arith.addf %70, %77 : vector<4x512xf32>
    %c495_i32 = arith.constant 495 : i32
    %79 = tpu.dynamic_rotate %4 by %c495_i32 dim 1 : vector<4x512xf32>, i32 -> vector<4x512xf32>
    %80 = arith.andi %13, %17 : vector<1x512xi1>
    %cst_30 = arith.constant 0.000000e+00 : f32
    %81 = vector.shape_cast %80 : vector<1x512xi1> to vector<1x512xi1>
    %82 = vector.broadcast %81 : vector<1x512xi1> to vector<4x512xi1>
    %83 = vector.broadcast %cst_30 : f32 to vector<4x512xf32>
    %84 = arith.select %82, %79, %83 : vector<4x512xi1>, vector<4x512xf32>
    %c0_31 = arith.constant 0 : index
    %c32 = arith.constant 32 : index
    %85 = vector.load %arg2[%c0_31, %c32] : memref<4x36xf32, #tpu.memory_space<vmem>>, vector<4x4xf32>
    %cst_32 = arith.constant dense<0.000000e+00> : vector<4x512xf32>
    %86 = tpu.matmul %85, %84, %cst_32 {dimension_numbers = #tpu.dot_dimension_numbers<[1], [0], [0], [1], [0, 0, 1, 1], [], []>} : vector<4x4xf32>, vector<4x512xf32>, vector<4x512xf32> -> vector<4x512xf32>
    %87 = arith.addf %78, %86 : vector<4x512xf32>
    %c0_33 = arith.constant 0 : index
    %c0_34 = arith.constant 0 : index
    %88 = vector.load %arg3[%c0_33, %c0_34] : memref<4x1xf32, #tpu.memory_space<vmem>>, vector<4x1xf32>
    %89 = vector.broadcast %88 : vector<4x1xf32> to vector<4x512xf32>
    %90 = arith.addf %87, %89 : vector<4x512xf32>
    %cst_35 = arith.constant 0.000000e+00 : f32
    %91 = vector.broadcast %cst_35 : f32 to vector<4x512xf32>
    %92 = arith.maximumf %90, %91 : vector<4x512xf32>
    %93 = vector.extract_strided_slice %92 {offsets = [0, 0], sizes = [4, 256], strides = [1, 1]} : vector<4x512xf32> to vector<4x256xf32>
    %c0_36 = arith.constant 0 : index
    %c0_37 = arith.constant 0 : index
    %c0_38 = arith.constant 0 : index
    %94 = vector.load %arg4[%c0_36, %c0_37, %c0_38] : memref<2x4x256xf32, #tpu.memory_space<vmem>>, vector<1x4x256xf32>
    %95 = vector.shape_cast %94 : vector<1x4x256xf32> to vector<4x256xf32>
    %96 = vector.shape_cast %93 : vector<4x256xf32> to vector<1x4x256xf32>
    tpu.vector_store %arg4[%c0_36, %c0_37, %c0_38], %96 {strides = array<i32>} : memref<2x4x256xf32, #tpu.memory_space<vmem>>, vector<1x4x256xf32>,
    %97 = vector.extract_strided_slice %92 {offsets = [0, 256], sizes = [4, 256], strides = [1, 1]} : vector<4x512xf32> to vector<4x256xf32>
    %c1_39 = arith.constant 1 : index
    %c0_40 = arith.constant 0 : index
    %c0_41 = arith.constant 0 : index
    %98 = vector.load %arg4[%c1_39, %c0_40, %c0_41] : memref<2x4x256xf32, #tpu.memory_space<vmem>>, vector<1x4x256xf32>
    %99 = vector.shape_cast %98 : vector<1x4x256xf32> to vector<4x256xf32>
    %100 = vector.shape_cast %97 : vector<4x256xf32> to vector<1x4x256xf32>
    tpu.vector_store %arg4[%c1_39, %c0_40, %c0_41], %100 {strides = array<i32>} : memref<2x4x256xf32, #tpu.memory_space<vmem>>, vector<1x4x256xf32>,
    return
  }
  func.func @transform_0(%arg0: i32) -> (i32, i32, i32) {
    %c0_i32 = arith.constant 0 : i32
    %c0_i32_0 = arith.constant 0 : i32
    %c0_i32_1 = arith.constant 0 : i32
    return %arg0, %c0_i32, %c0_i32_0 : i32, i32, i32
  }
  func.func @transform_1(%arg0: i32) -> (i32, i32) {
    %c0_i32 = arith.constant 0 : i32
    %c0_i32_0 = arith.constant 0 : i32
    %c0_i32_1 = arith.constant 0 : i32
    return %c0_i32, %c0_i32_0 : i32, i32
  }
  func.func @transform_2(%arg0: i32) -> (i32, i32) {
    %c0_i32 = arith.constant 0 : i32
    %c0_i32_0 = arith.constant 0 : i32
    %c0_i32_1 = arith.constant 0 : i32
    return %c0_i32, %c0_i32_0 : i32, i32
  }
  func.func @transform_3(%arg0: i32) -> (i32, i32, i32) {
    %c0_i32 = arith.constant 0 : i32
    %c0_i32_0 = arith.constant 0 : i32
    %c0_i32_1 = arith.constant 0 : i32
    return %arg0, %c0_i32, %c0_i32_0 : i32, i32, i32
  }
}

</mosaic_0001>

<llo_original>
// kernel: res_forward.1
$region0: #{res_forward.1}
  #allocation0 [shape = 'u32[]', space=smem, size = 0x4, offset = 0x4, fixed_abs, tag = 'smem constant byte address 0x4 - core index']
  #allocation1 [shape = 'u32[72,128]{1,0:T(1,128)}', space=vmem, size = 0x9000, scoped, tag = 'internal scratch']
  %s0 = inlined_call_operand.vmem [shape: f32[2,4,256], index: 0, kind: input, shape index: {}]
  %s1 = inlined_call_operand.vmem [shape: f32[4,36], index: 1, kind: input, shape index: {}]
  %s2 = inlined_call_operand.vmem [shape: f32[4,1], index: 2, kind: input, shape index: {}]
  %s3 = inlined_call_operand.vmem [shape: f32[2,4,256], index: 3, kind: output, shape index: {}]
  %s4 = sld [smem:[#allocation0]]
  $region22: #{res_forward.1} parent=0
    _
  %s6 = ssub.s32 1, %s4
  %s7 = scalar_select 0, %s6, %s4
  // Predicated region
  $region2: #{res_forward.1} parent=0 // pred_check
    _
  $region3: #{res_forward.1} parent=0 // pred_check_branch
    %9 = sbr.rel (0) target = $region5
  $region4: #{res_forward.1} parent=0 // pred_region
    _
  $region5: #{res_forward.1} parent=0 // pred_fallthru
    _
  // Predicated region
  $region6: #{res_forward.1} parent=0 // pred_check
    _
  $region7: #{res_forward.1} parent=0 // pred_check_branch
    %11 = sbr.rel (0) target = $region9
  $region8: #{res_forward.1} parent=0 // pred_region
    _
  $region9: #{res_forward.1} parent=0 // pred_fallthru
    _
  // Predicated region
  $region10: #{res_forward.1} parent=0 // pred_check
    _
  $region11: #{res_forward.1} parent=0 // pred_check_branch
    %13 = sbr.rel (0) target = $region13
  $region12: #{res_forward.1} parent=0 // pred_region
    _
  $region13: #{res_forward.1} parent=0 // pred_fallthru
    _
  %v14 = vld [vmem:[%s0] sm:$0xff]
  %s15 = scalar_lea.vmem %s0, 8
  %v16 = vld [vmem:[%s15] sm:$0xff]
  %18 = vst [vmem:[#allocation1] ss:$2 sm:$0xff] %v14
  %v19 = vld.sshfl [vmem:[#allocation1] sm:$0xff pattern:$0x75316420]
  %v20 = vld.sshfl [vmem:[#allocation1 + $0x8] sm:$0xff pattern:$0x75316420]
  %24 = vst [vmem:[#allocation1] ss:$2 sm:$0xff] %v16
  %v25 = vld.sshfl [vmem:[#allocation1] sm:$0xff pattern:$0x75316420]
  %v26 = vld.sshfl [vmem:[#allocation1 + $0x8] sm:$0xff pattern:$0x75316420]
  %v29 = vlaneseq
  %v30 = vand.u32 %v29, 127
  %v31 = vadd.s32 %v30, 128
  %v32 = vadd.s32 %v30, 256
  %v33 = vadd.s32 %v30, 384
  %v34 = vand.u32 %v30, 255
  %v35 = vand.u32 %v31, 255
  %v36 = vand.u32 %v32, 255
  %v37 = vand.u32 %v33, 255
  %v38 = vand.u32 %v34, 15
  %v39 = vand.u32 %v35, 15
  %v40 = vand.u32 %v36, 15
  %v41 = vand.u32 %v37, 15
  %vm42 = vcmp.ge.s32.totalorder %v34, 16
  %vm43 = vcmp.ge.s32.totalorder %v35, 16
  %vm44 = vcmp.ge.s32.totalorder %v36, 16
  %vm45 = vcmp.ge.s32.totalorder %v37, 16
  %vm46 = vcmp.lt.s32.totalorder %v34, 240
  %vm47 = vcmp.lt.s32.totalorder %v35, 240
  %vm48 = vcmp.lt.s32.totalorder %v36, 240
  %vm49 = vcmp.lt.s32.totalorder %v37, 240
  %vm50 = vcmp.gt.s32.totalorder %v38, 0
  %vm51 = vcmp.gt.s32.totalorder %v39, 0
  %vm52 = vcmp.gt.s32.totalorder %v40, 0
  %vm53 = vcmp.gt.s32.totalorder %v41, 0
  %vm54 = vcmp.lt.s32.totalorder %v38, 15
  %vm55 = vcmp.lt.s32.totalorder %v39, 15
  %vm56 = vcmp.lt.s32.totalorder %v40, 15
  %vm57 = vcmp.lt.s32.totalorder %v41, 15
  %58 = vrot.lane.b32.xlu0 %v19, 17
  %v59 = vpop.permute.xlu0 %58
  %60 = vrot.lane.b32.xlu0 %v20, 17
  %v61 = vpop.permute.xlu0 %60
  %62 = vrot.lane.b32.xlu0 %v25, 17
  %v63 = vpop.permute.xlu0 %62
  %64 = vrot.lane.b32.xlu0 %v26, 17
  %v65 = vpop.permute.xlu0 %64
  %vm66 = vcmp.lt.s32.totalorder %v30, 17
  %v67 = vsel %vm66, %v63, %v65
  %v68 = vsel %vm66, %v61, %v63
  %v69 = vsel %vm66, %v59, %v61
  %v70 = vsel %vm66, %v65, %v59
  %vm71 = vmand %vm42, %vm50
  %vm72 = vmand %vm43, %vm51
  %vm73 = vmand %vm44, %vm52
  %vm74 = vmand %vm45, %vm53
  %v75 = vsel %vm71, 1, 0
  %v76 = vsel %vm72, 1, 0
  %v77 = vsel %vm73, 1, 0
  %v78 = vsel %vm74, 1, 0
  %vm79 = vcmp.eq.s32.totalorder %v75, 1
  %vm80 = vcmp.eq.s32.totalorder %v76, 1
  %vm81 = vcmp.eq.s32.totalorder %v77, 1
  %vm82 = vcmp.eq.s32.totalorder %v78, 1
  %v83 = vsel %vm79, %v70, 0.0
  %v84 = vsel %vm80, %v69, 0.0
  %v85 = vsel %vm81, %v68, 0.0
  %v86 = vsel %vm82, %v67, 0.0
  %v87 = vld [vmem:[%s1] sm:$0xf]
  %88 = vrot.lane.b32.xlu0 %v19, 16
  %v89 = vpop.permute.xlu0 %88
  %90 = vrot.lane.b32.xlu0 %v20, 16
  %v91 = vpop.permute.xlu0 %90
  %92 = vrot.lane.b32.xlu0 %v25, 16
  %v93 = vpop.permute.xlu0 %92
  %94 = vrot.lane.b32.xlu0 %v26, 16
  %v95 = vpop.permute.xlu0 %94
  %vm96 = vcmp.lt.s32.totalorder %v30, 16
  %v97 = vsel %vm96, %v93, %v95
  %v98 = vsel %vm96, %v91, %v93
  %v99 = vsel %vm96, %v89, %v91
  %v100 = vsel %vm96, %v95, %v89
  %v101 = vsel %vm42, 1, 0
  %v102 = vsel %vm43, 1, 0
  %v103 = vsel %vm44, 1, 0
  %v104 = vsel %vm45, 1, 0
  %vm105 = vcmp.eq.s32.totalorder %v101, 1
  %vm106 = vcmp.eq.s32.totalorder %v102, 1
  %vm107 = vcmp.eq.s32.totalorder %v103, 1
  %vm108 = vcmp.eq.s32.totalorder %v104, 1
  %v109 = vsel %vm105, %v100, 0.0
  %v110 = vsel %vm106, %v99, 0.0
  %v111 = vsel %vm107, %v98, 0.0
  %v112 = vsel %vm108, %v97, 0.0
  %114 = vrot.lane.b32.xlu0 %v87, 124
  %v115 = vpop.permute.xlu0 %114
  %vm116 = vcmask 31744
  %v117 = vsel %vm116, %v115, 0
  %vm119 = vcmask 1043456
  %v121 = vsel %vm119, %v109, 0
  %v124 = vsel %vm119, %v110, 0
  %v127 = vsel %vm119, %v111, 0
  %v130 = vsel %vm119, %v112, 0
  %132 = vmatpush.msra.mxu0 0.0
  %133 = vmatpush.msra.mxu0 0.0
  %134 = vmatpush.msra.mxu0 0.0
  %135 = vmatpush.msra.mxu0 0.0
  %136 = vmatpush.msra.mxu0 0.0
  %137 = vmatpush.msra.mxu0 0.0
  %138 = vmatpush.msra.mxu0 0.0
  %139 = vmatpush.msra.mxu0 0.0
  %140 = vmatpush.msra.mxu0 0.0
  %141 = vmatpush.msra.mxu0 0.0
  %142 = vmatpush.msra.mxu0 0.0
  %143 = vmatpush.msra.mxu0 0.0
  %144 = vmatpush.msra.mxu0 0.0
  %145 = vmatpush.msra.mxu0 0.0
  %146 = vmatpush.msra.mxu0 0.0
  %147 = vmatpush.msra.mxu0 %v121
  %148 = vmatmul.f32.gmra.mxu0 %v117
  %v149 = vpop.f32.mrf.mxu0
  %v150 = vadd.f32 0.0, %v149
  %151 = vdwg.mxu0
  %152 = vmatpush.msra.mxu0 0.0
  %153 = vmatpush.msra.mxu0 0.0
  %154 = vmatpush.msra.mxu0 0.0
  %155 = vmatpush.msra.mxu0 0.0
  %156 = vmatpush.msra.mxu0 0.0
  %157 = vmatpush.msra.mxu0 0.0
  %158 = vmatpush.msra.mxu0 0.0
  %159 = vmatpush.msra.mxu0 0.0
  %160 = vmatpush.msra.mxu0 0.0
  %161 = vmatpush.msra.mxu0 0.0
  %162 = vmatpush.msra.mxu0 0.0
  %163 = vmatpush.msra.mxu0 0.0
  %164 = vmatpush.msra.mxu0 0.0
  %165 = vmatpush.msra.mxu0 0.0
  %166 = vmatpush.msra.mxu0 0.0
  %167 = vmatpush.msra.mxu0 %v124
  %168 = vmatmul.f32.gmra.mxu0 %v117
  %v169 = vpop.f32.mrf.mxu0
  %v170 = vadd.f32 0.0, %v169
  %171 = vdwg.mxu0
  %172 = vmatpush.msra.mxu0 0.0
  %173 = vmatpush.msra.mxu0 0.0
  %174 = vmatpush.msra.mxu0 0.0
  %175 = vmatpush.msra.mxu0 0.0
  %176 = vmatpush.msra.mxu0 0.0
  %177 = vmatpush.msra.mxu0 0.0
  %178 = vmatpush.msra.mxu0 0.0
  %179 = vmatpush.msra.mxu0 0.0
  %180 = vmatpush.msra.mxu0 0.0
  %181 = vmatpush.msra.mxu0 0.0
  %182 = vmatpush.msra.mxu0 0.0
  %183 = vmatpush.msra.mxu0 0.0
  %184 = vmatpush.msra.mxu0 0.0
  %185 = vmatpush.msra.mxu0 0.0
  %186 = vmatpush.msra.mxu0 0.0
  %187 = vmatpush.msra.mxu0 %v127
  %188 = vmatmul.f32.gmra.mxu0 %v117
  %v189 = vpop.f32.mrf.mxu0
  %v190 = vadd.f32 0.0, %v189
  %191 = vdwg.mxu0
  %192 = vmatpush.msra.mxu0 0.0
  %193 = vmatpush.msra.mxu0 0.0
  %194 = vmatpush.msra.mxu0 0.0
  %195 = vmatpush.msra.mxu0 0.0
  %196 = vmatpush.msra.mxu0 0.0
  %197 = vmatpush.msra.mxu0 0.0
  %198 = vmatpush.msra.mxu0 0.0
  %199 = vmatpush.msra.mxu0 0.0
  %200 = vmatpush.msra.mxu0 0.0
  %201 = vmatpush.msra.mxu0 0.0
  %202 = vmatpush.msra.mxu0 0.0
  %203 = vmatpush.msra.mxu0 0.0
  %204 = vmatpush.msra.mxu0 0.0
  %205 = vmatpush.msra.mxu0 0.0
  %206 = vmatpush.msra.mxu0 0.0
  %207 = vmatpush.msra.mxu0 %v130
  %208 = vmatmul.f32.gmra.mxu0 %v117
  %v209 = vpop.f32.mrf.mxu0
  %v210 = vadd.f32 0.0, %v209
  %211 = vdwg.mxu0
  %v212 = vsel %vm116, %v87, 0
  %v215 = vsel %vm119, %v83, 0
  %v218 = vsel %vm119, %v84, 0
  %v221 = vsel %vm119, %v85, 0
  %v224 = vsel %vm119, %v86, 0
  %226 = vmatpush.msra.mxu0 0.0
  %227 = vmatpush.msra.mxu0 0.0
  %228 = vmatpush.msra.mxu0 0.0
  %229 = vmatpush.msra.mxu0 0.0
  %230 = vmatpush.msra.mxu0 0.0
  %231 = vmatpush.msra.mxu0 0.0
  %232 = vmatpush.msra.mxu0 0.0
  %233 = vmatpush.msra.mxu0 0.0
  %234 = vmatpush.msra.mxu0 0.0
  %235 = vmatpush.msra.mxu0 0.0
  %236 = vmatpush.msra.mxu0 0.0
  %237 = vmatpush.msra.mxu0 0.0
  %238 = vmatpush.msra.mxu0 0.0
  %239 = vmatpush.msra.mxu0 0.0
  %240 = vmatpush.msra.mxu0 0.0
  %241 = vmatpush.msra.mxu0 %v215
  %242 = vmatmul.f32.gmra.mxu0 %v212
  %v243 = vpop.f32.mrf.mxu0
  %v244 = vadd.f32 %v150, %v243
  %245 = vdwg.mxu0
  %246 = vmatpush.msra.mxu0 0.0
  %247 = vmatpush.msra.mxu0 0.0
  %248 = vmatpush.msra.mxu0 0.0
  %249 = vmatpush.msra.mxu0 0.0
  %250 = vmatpush.msra.mxu0 0.0
  %251 = vmatpush.msra.mxu0 0.0
  %252 = vmatpush.msra.mxu0 0.0
  %253 = vmatpush.msra.mxu0 0.0
  %254 = vmatpush.msra.mxu0 0.0
  %255 = vmatpush.msra.mxu0 0.0
  %256 = vmatpush.msra.mxu0 0.0
  %257 = vmatpush.msra.mxu0 0.0
  %258 = vmatpush.msra.mxu0 0.0
  %259 = vmatpush.msra.mxu0 0.0
  %260 = vmatpush.msra.mxu0 0.0
  %261 = vmatpush.msra.mxu0 %v218
  %262 = vmatmul.f32.gmra.mxu0 %v212
  %v263 = vpop.f32.mrf.mxu0
  %v264 = vadd.f32 %v170, %v263
  %265 = vdwg.mxu0
  %266 = vmatpush.msra.mxu0 0.0
  %267 = vmatpush.msra.mxu0 0.0
  %268 = vmatpush.msra.mxu0 0.0
  %269 = vmatpush.msra.mxu0 0.0
  %270 = vmatpush.msra.mxu0 0.0
  %271 = vmatpush.msra.mxu0 0.0
  %272 = vmatpush.msra.mxu0 0.0
  %273 = vmatpush.msra.mxu0 0.0
  %274 = vmatpush.msra.mxu0 0.0
  %275 = vmatpush.msra.mxu0 0.0
  %276 = vmatpush.msra.mxu0 0.0
  %277 = vmatpush.msra.mxu0 0.0
  %278 = vmatpush.msra.mxu0 0.0
  %279 = vmatpush.msra.mxu0 0.0
  %280 = vmatpush.msra.mxu0 0.0
  %281 = vmatpush.msra.mxu0 %v221
  %282 = vmatmul.f32.gmra.mxu0 %v212
  %v283 = vpop.f32.mrf.mxu0
  %v284 = vadd.f32 %v190, %v283
  %285 = vdwg.mxu0
  %286 = vmatpush.msra.mxu0 0.0
  %287 = vmatpush.msra.mxu0 0.0
  %288 = vmatpush.msra.mxu0 0.0
  %289 = vmatpush.msra.mxu0 0.0
  %290 = vmatpush.msra.mxu0 0.0
  %291 = vmatpush.msra.mxu0 0.0
  %292 = vmatpush.msra.mxu0 0.0
  %293 = vmatpush.msra.mxu0 0.0
  %294 = vmatpush.msra.mxu0 0.0
  %295 = vmatpush.msra.mxu0 0.0
  %296 = vmatpush.msra.mxu0 0.0
  %297 = vmatpush.msra.mxu0 0.0
  %298 = vmatpush.msra.mxu0 0.0
  %299 = vmatpush.msra.mxu0 0.0
  %300 = vmatpush.msra.mxu0 0.0
  %301 = vmatpush.msra.mxu0 %v224
  %302 = vmatmul.f32.gmra.mxu0 %v212
  %v303 = vpop.f32.mrf.mxu0
  %v304 = vadd.f32 %v210, %v303
  %305 = vdwg.mxu0
  %306 = vrot.lane.b32.xlu0 %v19, 15
  %v307 = vpop.permute.xlu0 %306
  %308 = vrot.lane.b32.xlu0 %v20, 15
  %v309 = vpop.permute.xlu0 %308
  %310 = vrot.lane.b32.xlu0 %v25, 15
  %v311 = vpop.permute.xlu0 %310
  %312 = vrot.lane.b32.xlu0 %v26, 15
  %v313 = vpop.permute.xlu0 %312
  %vm314 = vcmp.lt.s32.totalorder %v30, 15
  %v315 = vsel %vm314, %v311, %v313
  %v316 = vsel %vm314, %v309, %v311
  %v317 = vsel %vm314, %v307, %v309
  %v318 = vsel %vm314, %v313, %v307
  %vm319 = vmand %vm42, %vm54
  %vm320 = vmand %vm43, %vm55
  %vm321 = vmand %vm44, %vm56
  %vm322 = vmand %vm45, %vm57
  %v323 = vsel %vm319, 1, 0
  %v324 = vsel %vm320, 1, 0
  %v325 = vsel %vm321, 1, 0
  %v326 = vsel %vm322, 1, 0
  %vm327 = vcmp.eq.s32.totalorder %v323, 1
  %vm328 = vcmp.eq.s32.totalorder %v324, 1
  %vm329 = vcmp.eq.s32.totalorder %v325, 1
  %vm330 = vcmp.eq.s32.totalorder %v326, 1
  %v331 = vsel %vm327, %v318, 0.0
  %v332 = vsel %vm328, %v317, 0.0
  %v333 = vsel %vm329, %v316, 0.0
  %v334 = vsel %vm330, %v315, 0.0
  %335 = vrot.lane.b32.xlu0 %v87, 120
  %v336 = vpop.permute.xlu0 %335
  %v337 = vsel %vm116, %v336, 0
  %v340 = vsel %vm119, %v331, 0
  %v343 = vsel %vm119, %v332, 0
  %v346 = vsel %vm119, %v333, 0
  %v349 = vsel %vm119, %v334, 0
  %351 = vmatpush.msra.mxu0 0.0
  %352 = vmatpush.msra.mxu0 0.0
  %353 = vmatpush.msra.mxu0 0.0
  %354 = vmatpush.msra.mxu0 0.0
  %355 = vmatpush.msra.mxu0 0.0
  %356 = vmatpush.msra.mxu0 0.0
  %357 = vmatpush.msra.mxu0 0.0
  %358 = vmatpush.msra.mxu0 0.0
  %359 = vmatpush.msra.mxu0 0.0
  %360 = vmatpush.msra.mxu0 0.0
  %361 = vmatpush.msra.mxu0 0.0
  %362 = vmatpush.msra.mxu0 0.0
  %363 = vmatpush.msra.mxu0 0.0
  %364 = vmatpush.msra.mxu0 0.0
  %365 = vmatpush.msra.mxu0 0.0
  %366 = vmatpush.msra.mxu0 %v340
  %367 = vmatmul.f32.gmra.mxu0 %v337
  %v368 = vpop.f32.mrf.mxu0
  %v369 = vadd.f32 0.0, %v368
  %370 = vdwg.mxu0
  %371 = vmatpush.msra.mxu0 0.0
  %372 = vmatpush.msra.mxu0 0.0
  %373 = vmatpush.msra.mxu0 0.0
  %374 = vmatpush.msra.mxu0 0.0
  %375 = vmatpush.msra.mxu0 0.0
  %376 = vmatpush.msra.mxu0 0.0
  %377 = vmatpush.msra.mxu0 0.0
  %378 = vmatpush.msra.mxu0 0.0
  %379 = vmatpush.msra.mxu0 0.0
  %380 = vmatpush.msra.mxu0 0.0
  %381 = vmatpush.msra.mxu0 0.0
  %382 = vmatpush.msra.mxu0 0.0
  %383 = vmatpush.msra.mxu0 0.0
  %384 = vmatpush.msra.mxu0 0.0
  %385 = vmatpush.msra.mxu0 0.0
  %386 = vmatpush.msra.mxu0 %v343
  %387 = vmatmul.f32.gmra.mxu0 %v337
  %v388 = vpop.f32.mrf.mxu0
  %v389 = vadd.f32 0.0, %v388
  %390 = vdwg.mxu0
  %391 = vmatpush.msra.mxu0 0.0
  %392 = vmatpush.msra.mxu0 0.0
  %393 = vmatpush.msra.mxu0 0.0
  %394 = vmatpush.msra.mxu0 0.0
  %395 = vmatpush.msra.mxu0 0.0
  %396 = vmatpush.msra.mxu0 0.0
  %397 = vmatpush.msra.mxu0 0.0
  %398 = vmatpush.msra.mxu0 0.0
  %399 = vmatpush.msra.mxu0 0.0
  %400 = vmatpush.msra.mxu0 0.0
  %401 = vmatpush.msra.mxu0 0.0
  %402 = vmatpush.msra.mxu0 0.0
  %403 = vmatpush.msra.mxu0 0.0
  %404 = vmatpush.msra.mxu0 0.0
  %405 = vmatpush.msra.mxu0 0.0
  %406 = vmatpush.msra.mxu0 %v346
  %407 = vmatmul.f32.gmra.mxu0 %v337
  %v408 = vpop.f32.mrf.mxu0
  %v409 = vadd.f32 0.0, %v408
  %410 = vdwg.mxu0
  %411 = vmatpush.msra.mxu0 0.0
  %412 = vmatpush.msra.mxu0 0.0
  %413 = vmatpush.msra.mxu0 0.0
  %414 = vmatpush.msra.mxu0 0.0
  %415 = vmatpush.msra.mxu0 0.0
  %416 = vmatpush.msra.mxu0 0.0
  %417 = vmatpush.msra.mxu0 0.0
  %418 = vmatpush.msra.mxu0 0.0
  %419 = vmatpush.msra.mxu0 0.0
  %420 = vmatpush.msra.mxu0 0.0
  %421 = vmatpush.msra.mxu0 0.0
  %422 = vmatpush.msra.mxu0 0.0
  %423 = vmatpush.msra.mxu0 0.0
  %424 = vmatpush.msra.mxu0 0.0
  %425 = vmatpush.msra.mxu0 0.0
  %426 = vmatpush.msra.mxu0 %v349
  %427 = vmatmul.f32.gmra.mxu0 %v337
  %v428 = vpop.f32.mrf.mxu0
  %v429 = vadd.f32 0.0, %v428
  %430 = vdwg.mxu0
  %v431 = vadd.f32 %v244, %v369
  %v432 = vadd.f32 %v264, %v389
  %v433 = vadd.f32 %v284, %v409
  %v434 = vadd.f32 %v304, %v429
  %435 = vrot.lane.b32.xlu0 %v19, 1
  %v436 = vpop.permute.xlu0 %435
  %437 = vrot.lane.b32.xlu0 %v20, 1
  %v438 = vpop.permute.xlu0 %437
  %439 = vrot.lane.b32.xlu0 %v25, 1
  %v440 = vpop.permute.xlu0 %439
  %441 = vrot.lane.b32.xlu0 %v26, 1
  %v442 = vpop.permute.xlu0 %441
  %vm443 = vcmp.lt.s32.totalorder %v30, 1
  %v444 = vsel %vm443, %v440, %v442
  %v445 = vsel %vm443, %v438, %v440
  %v446 = vsel %vm443, %v436, %v438
  %v447 = vsel %vm443, %v442, %v436
  %v448 = vsel %vm50, 1, 0
  %v449 = vsel %vm51, 1, 0
  %v450 = vsel %vm52, 1, 0
  %v451 = vsel %vm53, 1, 0
  %vm452 = vcmp.eq.s32.totalorder %v448, 1
  %vm453 = vcmp.eq.s32.totalorder %v449, 1
  %vm454 = vcmp.eq.s32.totalorder %v450, 1
  %vm455 = vcmp.eq.s32.totalorder %v451, 1
  %v456 = vsel %vm452, %v447, 0.0
  %v457 = vsel %vm453, %v446, 0.0
  %v458 = vsel %vm454, %v445, 0.0
  %v459 = vsel %vm455, %v444, 0.0
  %460 = vrot.lane.b32.xlu0 %v87, 116
  %v461 = vpop.permute.xlu0 %460
  %v462 = vsel %vm116, %v461, 0
  %v465 = vsel %vm119, %v456, 0
  %v468 = vsel %vm119, %v457, 0
  %v471 = vsel %vm119, %v458, 0
  %v474 = vsel %vm119, %v459, 0
  %476 = vmatpush.msra.mxu0 0.0
  %477 = vmatpush.msra.mxu0 0.0
  %478 = vmatpush.msra.mxu0 0.0
  %479 = vmatpush.msra.mxu0 0.0
  %480 = vmatpush.msra.mxu0 0.0
  %481 = vmatpush.msra.mxu0 0.0
  %482 = vmatpush.msra.mxu0 0.0
  %483 = vmatpush.msra.mxu0 0.0
  %484 = vmatpush.msra.mxu0 0.0
  %485 = vmatpush.msra.mxu0 0.0
  %486 = vmatpush.msra.mxu0 0.0
  %487 = vmatpush.msra.mxu0 0.0
  %488 = vmatpush.msra.mxu0 0.0
  %489 = vmatpush.msra.mxu0 0.0
  %490 = vmatpush.msra.mxu0 0.0
  %491 = vmatpush.msra.mxu0 %v465
  %492 = vmatmul.f32.gmra.mxu0 %v462
  %v493 = vpop.f32.mrf.mxu0
  %v494 = vadd.f32 0.0, %v493
  %495 = vdwg.mxu0
  %496 = vmatpush.msra.mxu0 0.0
  %497 = vmatpush.msra.mxu0 0.0
  %498 = vmatpush.msra.mxu0 0.0
  %499 = vmatpush.msra.mxu0 0.0
  %500 = vmatpush.msra.mxu0 0.0
  %501 = vmatpush.msra.mxu0 0.0
  %502 = vmatpush.msra.mxu0 0.0
  %503 = vmatpush.msra.mxu0 0.0
  %504 = vmatpush.msra.mxu0 0.0
  %505 = vmatpush.msra.mxu0 0.0
  %506 = vmatpush.msra.mxu0 0.0
  %507 = vmatpush.msra.mxu0 0.0
  %508 = vmatpush.msra.mxu0 0.0
  %509 = vmatpush.msra.mxu0 0.0
  %510 = vmatpush.msra.mxu0 0.0
  %511 = vmatpush.msra.mxu0 %v468
  %512 = vmatmul.f32.gmra.mxu0 %v462
  %v513 = vpop.f32.mrf.mxu0
  %v514 = vadd.f32 0.0, %v513
  %515 = vdwg.mxu0
  %516 = vmatpush.msra.mxu0 0.0
  %517 = vmatpush.msra.mxu0 0.0
  %518 = vmatpush.msra.mxu0 0.0
  %519 = vmatpush.msra.mxu0 0.0
  %520 = vmatpush.msra.mxu0 0.0
  %521 = vmatpush.msra.mxu0 0.0
  %522 = vmatpush.msra.mxu0 0.0
  %523 = vmatpush.msra.mxu0 0.0
  %524 = vmatpush.msra.mxu0 0.0
  %525 = vmatpush.msra.mxu0 0.0
  %526 = vmatpush.msra.mxu0 0.0
  %527 = vmatpush.msra.mxu0 0.0
  %528 = vmatpush.msra.mxu0 0.0
  %529 = vmatpush.msra.mxu0 0.0
  %530 = vmatpush.msra.mxu0 0.0
  %531 = vmatpush.msra.mxu0 %v471
  %532 = vmatmul.f32.gmra.mxu0 %v462
  %v533 = vpop.f32.mrf.mxu0
  %v534 = vadd.f32 0.0, %v533
  %535 = vdwg.mxu0
  %536 = vmatpush.msra.mxu0 0.0
  %537 = vmatpush.msra.mxu0 0.0
  %538 = vmatpush.msra.mxu0 0.0
  %539 = vmatpush.msra.mxu0 0.0
  %540 = vmatpush.msra.mxu0 0.0
  %541 = vmatpush.msra.mxu0 0.0
  %542 = vmatpush.msra.mxu0 0.0
  %543 = vmatpush.msra.mxu0 0.0
  %544 = vmatpush.msra.mxu0 0.0
  %545 = vmatpush.msra.mxu0 0.0
  %546 = vmatpush.msra.mxu0 0.0
  %547 = vmatpush.msra.mxu0 0.0
  %548 = vmatpush.msra.mxu0 0.0
  %549 = vmatpush.msra.mxu0 0.0
  %550 = vmatpush.msra.mxu0 0.0
  %551 = vmatpush.msra.mxu0 %v474
  %552 = vmatmul.f32.gmra.mxu0 %v462
  %v553 = vpop.f32.mrf.mxu0
  %v554 = vadd.f32 0.0, %v553
  %555 = vdwg.mxu0
  %v556 = vadd.f32 %v431, %v494
  %v557 = vadd.f32 %v432, %v514
  %v558 = vadd.f32 %v433, %v534
  %v559 = vadd.f32 %v434, %v554
  %560 = vrot.lane.b32.xlu0 %v87, 112
  %v561 = vpop.permute.xlu0 %560
  %v562 = vsel %vm116, %v561, 0
  %v564 = vsel %vm119, %v19, 0
  %v566 = vsel %vm119, %v20, 0
  %v568 = vsel %vm119, %v25, 0
  %v570 = vsel %vm119, %v26, 0
  %572 = vmatpush.msra.mxu0 0.0
  %573 = vmatpush.msra.mxu0 0.0
  %574 = vmatpush.msra.mxu0 0.0
  %575 = vmatpush.msra.mxu0 0.0
  %576 = vmatpush.msra.mxu0 0.0
  %577 = vmatpush.msra.mxu0 0.0
  %578 = vmatpush.msra.mxu0 0.0
  %579 = vmatpush.msra.mxu0 0.0
  %580 = vmatpush.msra.mxu0 0.0
  %581 = vmatpush.msra.mxu0 0.0
  %582 = vmatpush.msra.mxu0 0.0
  %583 = vmatpush.msra.mxu0 0.0
  %584 = vmatpush.msra.mxu0 0.0
  %585 = vmatpush.msra.mxu0 0.0
  %586 = vmatpush.msra.mxu0 0.0
  %587 = vmatpush.msra.mxu0 %v564
  %588 = vmatmul.f32.gmra.mxu0 %v562
  %v589 = vpop.f32.mrf.mxu0
  %v590 = vadd.f32 0.0, %v589
  %591 = vdwg.mxu0
  %592 = vmatpush.msra.mxu0 0.0
  %593 = vmatpush.msra.mxu0 0.0
  %594 = vmatpush.msra.mxu0 0.0
  %595 = vmatpush.msra.mxu0 0.0
  %596 = vmatpush.msra.mxu0 0.0
  %597 = vmatpush.msra.mxu0 0.0
  %598 = vmatpush.msra.mxu0 0.0
  %599 = vmatpush.msra.mxu0 0.0
  %600 = vmatpush.msra.mxu0 0.0
  %601 = vmatpush.msra.mxu0 0.0
  %602 = vmatpush.msra.mxu0 0.0
  %603 = vmatpush.msra.mxu0 0.0
  %604 = vmatpush.msra.mxu0 0.0
  %605 = vmatpush.msra.mxu0 0.0
  %606 = vmatpush.msra.mxu0 0.0
  %607 = vmatpush.msra.mxu0 %v566
  %608 = vmatmul.f32.gmra.mxu0 %v562
  %v609 = vpop.f32.mrf.mxu0
  %v610 = vadd.f32 0.0, %v609
  %611 = vdwg.mxu0
  %612 = vmatpush.msra.mxu0 0.0
  %613 = vmatpush.msra.mxu0 0.0
  %614 = vmatpush.msra.mxu0 0.0
  %615 = vmatpush.msra.mxu0 0.0
  %616 = vmatpush.msra.mxu0 0.0
  %617 = vmatpush.msra.mxu0 0.0
  %618 = vmatpush.msra.mxu0 0.0
  %619 = vmatpush.msra.mxu0 0.0
  %620 = vmatpush.msra.mxu0 0.0
  %621 = vmatpush.msra.mxu0 0.0
  %622 = vmatpush.msra.mxu0 0.0
  %623 = vmatpush.msra.mxu0 0.0
  %624 = vmatpush.msra.mxu0 0.0
  %625 = vmatpush.msra.mxu0 0.0
  %626 = vmatpush.msra.mxu0 0.0
  %627 = vmatpush.msra.mxu0 %v568
  %628 = vmatmul.f32.gmra.mxu0 %v562
  %v629 = vpop.f32.mrf.mxu0
  %v630 = vadd.f32 0.0, %v629
  %631 = vdwg.mxu0
  %632 = vmatpush.msra.mxu0 0.0
  %633 = vmatpush.msra.mxu0 0.0
  %634 = vmatpush.msra.mxu0 0.0
  %635 = vmatpush.msra.mxu0 0.0
  %636 = vmatpush.msra.mxu0 0.0
  %637 = vmatpush.msra.mxu0 0.0
  %638 = vmatpush.msra.mxu0 0.0
  %639 = vmatpush.msra.mxu0 0.0
  %640 = vmatpush.msra.mxu0 0.0
  %641 = vmatpush.msra.mxu0 0.0
  %642 = vmatpush.msra.mxu0 0.0
  %643 = vmatpush.msra.mxu0 0.0
  %644 = vmatpush.msra.mxu0 0.0
  %645 = vmatpush.msra.mxu0 0.0
  %646 = vmatpush.msra.mxu0 0.0
  %647 = vmatpush.msra.mxu0 %v570
  %648 = vmatmul.f32.gmra.mxu0 %v562
  %v649 = vpop.f32.mrf.mxu0
  %v650 = vadd.f32 0.0, %v649
  %651 = vdwg.mxu0
  %v652 = vadd.f32 %v556, %v590
  %v653 = vadd.f32 %v557, %v610
  %v654 = vadd.f32 %v558, %v630
  %v655 = vadd.f32 %v559, %v650
  %656 = vrot.lane.b32.xlu0 %v19, 127
  %v657 = vpop.permute.xlu0 %656
  %658 = vrot.lane.b32.xlu0 %v20, 127
  %v659 = vpop.permute.xlu0 %658
  %660 = vrot.lane.b32.xlu0 %v25, 127
  %v661 = vpop.permute.xlu0 %660
  %662 = vrot.lane.b32.xlu0 %v26, 127
  %v663 = vpop.permute.xlu0 %662
  %vm664 = vcmp.lt.s32.totalorder %v30, 127
  %v665 = vsel %vm664, %v661, %v663
  %v666 = vsel %vm664, %v659, %v661
  %v667 = vsel %vm664, %v657, %v659
  %v668 = vsel %vm664, %v663, %v657
  %v669 = vsel %vm54, 1, 0
  %v670 = vsel %vm55, 1, 0
  %v671 = vsel %vm56, 1, 0
  %v672 = vsel %vm57, 1, 0
  %vm673 = vcmp.eq.s32.totalorder %v669, 1
  %vm674 = vcmp.eq.s32.totalorder %v670, 1
  %vm675 = vcmp.eq.s32.totalorder %v671, 1
  %vm676 = vcmp.eq.s32.totalorder %v672, 1
  %v677 = vsel %vm673, %v667, 0.0
  %v678 = vsel %vm674, %v666, 0.0
  %v679 = vsel %vm675, %v665, 0.0
  %v680 = vsel %vm676, %v668, 0.0
  %681 = vrot.lane.b32.xlu0 %v87, 108
  %v682 = vpop.permute.xlu0 %681
  %v683 = vsel %vm116, %v682, 0
  %v686 = vsel %vm119, %v677, 0
  %v689 = vsel %vm119, %v678, 0
  %v692 = vsel %vm119, %v679, 0
  %v695 = vsel %vm119, %v680, 0
  %697 = vmatpush.msra.mxu0 0.0
  %698 = vmatpush.msra.mxu0 0.0
  %699 = vmatpush.msra.mxu0 0.0
  %700 = vmatpush.msra.mxu0 0.0
  %701 = vmatpush.msra.mxu0 0.0
  %702 = vmatpush.msra.mxu0 0.0
  %703 = vmatpush.msra.mxu0 0.0
  %704 = vmatpush.msra.mxu0 0.0
  %705 = vmatpush.msra.mxu0 0.0
  %706 = vmatpush.msra.mxu0 0.0
  %707 = vmatpush.msra.mxu0 0.0
  %708 = vmatpush.msra.mxu0 0.0
  %709 = vmatpush.msra.mxu0 0.0
  %710 = vmatpush.msra.mxu0 0.0
  %711 = vmatpush.msra.mxu0 0.0
  %712 = vmatpush.msra.mxu0 %v686
  %713 = vmatmul.f32.gmra.mxu0 %v683
  %v714 = vpop.f32.mrf.mxu0
  %v715 = vadd.f32 0.0, %v714
  %716 = vdwg.mxu0
  %717 = vmatpush.msra.mxu0 0.0
  %718 = vmatpush.msra.mxu0 0.0
  %719 = vmatpush.msra.mxu0 0.0
  %720 = vmatpush.msra.mxu0 0.0
  %721 = vmatpush.msra.mxu0 0.0
  %722 = vmatpush.msra.mxu0 0.0
  %723 = vmatpush.msra.mxu0 0.0
  %724 = vmatpush.msra.mxu0 0.0
  %725 = vmatpush.msra.mxu0 0.0
  %726 = vmatpush.msra.mxu0 0.0
  %727 = vmatpush.msra.mxu0 0.0
  %728 = vmatpush.msra.mxu0 0.0
  %729 = vmatpush.msra.mxu0 0.0
  %730 = vmatpush.msra.mxu0 0.0
  %731 = vmatpush.msra.mxu0 0.0
  %732 = vmatpush.msra.mxu0 %v689
  %733 = vmatmul.f32.gmra.mxu0 %v683
  %v734 = vpop.f32.mrf.mxu0
  %v735 = vadd.f32 0.0, %v734
  %736 = vdwg.mxu0
  %737 = vmatpush.msra.mxu0 0.0
  %738 = vmatpush.msra.mxu0 0.0
  %739 = vmatpush.msra.mxu0 0.0
  %740 = vmatpush.msra.mxu0 0.0
  %741 = vmatpush.msra.mxu0 0.0
  %742 = vmatpush.msra.mxu0 0.0
  %743 = vmatpush.msra.mxu0 0.0
  %744 = vmatpush.msra.mxu0 0.0
  %745 = vmatpush.msra.mxu0 0.0
  %746 = vmatpush.msra.mxu0 0.0
  %747 = vmatpush.msra.mxu0 0.0
  %748 = vmatpush.msra.mxu0 0.0
  %749 = vmatpush.msra.mxu0 0.0
  %750 = vmatpush.msra.mxu0 0.0
  %751 = vmatpush.msra.mxu0 0.0
  %752 = vmatpush.msra.mxu0 %v692
  %753 = vmatmul.f32.gmra.mxu0 %v683
  %v754 = vpop.f32.mrf.mxu0
  %v755 = vadd.f32 0.0, %v754
  %756 = vdwg.mxu0
  %757 = vmatpush.msra.mxu0 0.0
  %758 = vmatpush.msra.mxu0 0.0
  %759 = vmatpush.msra.mxu0 0.0
  %760 = vmatpush.msra.mxu0 0.0
  %761 = vmatpush.msra.mxu0 0.0
  %762 = vmatpush.msra.mxu0 0.0
  %763 = vmatpush.msra.mxu0 0.0
  %764 = vmatpush.msra.mxu0 0.0
  %765 = vmatpush.msra.mxu0 0.0
  %766 = vmatpush.msra.mxu0 0.0
  %767 = vmatpush.msra.mxu0 0.0
  %768 = vmatpush.msra.mxu0 0.0
  %769 = vmatpush.msra.mxu0 0.0
  %770 = vmatpush.msra.mxu0 0.0
  %771 = vmatpush.msra.mxu0 0.0
  %772 = vmatpush.msra.mxu0 %v695
  %773 = vmatmul.f32.gmra.mxu0 %v683
  %v774 = vpop.f32.mrf.mxu0
  %v775 = vadd.f32 0.0, %v774
  %776 = vdwg.mxu0
  %v777 = vadd.f32 %v652, %v715
  %v778 = vadd.f32 %v653, %v735
  %v779 = vadd.f32 %v654, %v755
  %v780 = vadd.f32 %v655, %v775
  %781 = vrot.lane.b32.xlu0 %v19, 113
  %v782 = vpop.permute.xlu0 %781
  %783 = vrot.lane.b32.xlu0 %v20, 113
  %v784 = vpop.permute.xlu0 %783
  %785 = vrot.lane.b32.xlu0 %v25, 113
  %v786 = vpop.permute.xlu0 %785
  %787 = vrot.lane.b32.xlu0 %v26, 113
  %v788 = vpop.permute.xlu0 %787
  %vm789 = vcmp.lt.s32.totalorder %v30, 113
  %v790 = vsel %vm789, %v786, %v788
  %v791 = vsel %vm789, %v784, %v786
  %v792 = vsel %vm789, %v782, %v784
  %v793 = vsel %vm789, %v788, %v782
  %vm794 = vmand %vm46, %vm50
  %vm795 = vmand %vm47, %vm51
  %vm796 = vmand %vm48, %vm52
  %vm797 = vmand %vm49, %vm53
  %v798 = vsel %vm794, 1, 0
  %v799 = vsel %vm795, 1, 0
  %v800 = vsel %vm796, 1, 0
  %v801 = vsel %vm797, 1, 0
  %vm802 = vcmp.eq.s32.totalorder %v798, 1
  %vm803 = vcmp.eq.s32.totalorder %v799, 1
  %vm804 = vcmp.eq.s32.totalorder %v800, 1
  %vm805 = vcmp.eq.s32.totalorder %v801, 1
  %v806 = vsel %vm802, %v792, 0.0
  %v807 = vsel %vm803, %v791, 0.0
  %v808 = vsel %vm804, %v790, 0.0
  %v809 = vsel %vm805, %v793, 0.0
  %810 = vrot.lane.b32.xlu0 %v87, 104
  %v811 = vpop.permute.xlu0 %810
  %v812 = vsel %vm116, %v811, 0
  %v815 = vsel %vm119, %v806, 0
  %v818 = vsel %vm119, %v807, 0
  %v821 = vsel %vm119, %v808, 0
  %v824 = vsel %vm119, %v809, 0
  %826 = vmatpush.msra.mxu0 0.0
  %827 = vmatpush.msra.mxu0 0.0
  %828 = vmatpush.msra.mxu0 0.0
  %829 = vmatpush.msra.mxu0 0.0
  %830 = vmatpush.msra.mxu0 0.0
  %831 = vmatpush.msra.mxu0 0.0
  %832 = vmatpush.msra.mxu0 0.0
  %833 = vmatpush.msra.mxu0 0.0
  %834 = vmatpush.msra.mxu0 0.0
  %835 = vmatpush.msra.mxu0 0.0
  %836 = vmatpush.msra.mxu0 0.0
  %837 = vmatpush.msra.mxu0 0.0
  %838 = vmatpush.msra.mxu0 0.0
  %839 = vmatpush.msra.mxu0 0.0
  %840 = vmatpush.msra.mxu0 0.0
  %841 = vmatpush.msra.mxu0 %v815
  %842 = vmatmul.f32.gmra.mxu0 %v812
  %v843 = vpop.f32.mrf.mxu0
  %v844 = vadd.f32 0.0, %v843
  %845 = vdwg.mxu0
  %846 = vmatpush.msra.mxu0 0.0
  %847 = vmatpush.msra.mxu0 0.0
  %848 = vmatpush.msra.mxu0 0.0
  %849 = vmatpush.msra.mxu0 0.0
  %850 = vmatpush.msra.mxu0 0.0
  %851 = vmatpush.msra.mxu0 0.0
  %852 = vmatpush.msra.mxu0 0.0
  %853 = vmatpush.msra.mxu0 0.0
  %854 = vmatpush.msra.mxu0 0.0
  %855 = vmatpush.msra.mxu0 0.0
  %856 = vmatpush.msra.mxu0 0.0
  %857 = vmatpush.msra.mxu0 0.0
  %858 = vmatpush.msra.mxu0 0.0
  %859 = vmatpush.msra.mxu0 0.0
  %860 = vmatpush.msra.mxu0 0.0
  %861 = vmatpush.msra.mxu0 %v818
  %862 = vmatmul.f32.gmra.mxu0 %v812
  %v863 = vpop.f32.mrf.mxu0
  %v864 = vadd.f32 0.0, %v863
  %865 = vdwg.mxu0
  %866 = vmatpush.msra.mxu0 0.0
  %867 = vmatpush.msra.mxu0 0.0
  %868 = vmatpush.msra.mxu0 0.0
  %869 = vmatpush.msra.mxu0 0.0
  %870 = vmatpush.msra.mxu0 0.0
  %871 = vmatpush.msra.mxu0 0.0
  %872 = vmatpush.msra.mxu0 0.0
  %873 = vmatpush.msra.mxu0 0.0
  %874 = vmatpush.msra.mxu0 0.0
  %875 = vmatpush.msra.mxu0 0.0
  %876 = vmatpush.msra.mxu0 0.0
  %877 = vmatpush.msra.mxu0 0.0
  %878 = vmatpush.msra.mxu0 0.0
  %879 = vmatpush.msra.mxu0 0.0
  %880 = vmatpush.msra.mxu0 0.0
  %881 = vmatpush.msra.mxu0 %v821
  %882 = vmatmul.f32.gmra.mxu0 %v812
  %v883 = vpop.f32.mrf.mxu0
  %v884 = vadd.f32 0.0, %v883
  %885 = vdwg.mxu0
  %886 = vmatpush.msra.mxu0 0.0
  %887 = vmatpush.msra.mxu0 0.0
  %888 = vmatpush.msra.mxu0 0.0
  %889 = vmatpush.msra.mxu0 0.0
  %890 = vmatpush.msra.mxu0 0.0
  %891 = vmatpush.msra.mxu0 0.0
  %892 = vmatpush.msra.mxu0 0.0
  %893 = vmatpush.msra.mxu0 0.0
  %894 = vmatpush.msra.mxu0 0.0
  %895 = vmatpush.msra.mxu0 0.0
  %896 = vmatpush.msra.mxu0 0.0
  %897 = vmatpush.msra.mxu0 0.0
  %898 = vmatpush.msra.mxu0 0.0
  %899 = vmatpush.msra.mxu0 0.0
  %900 = vmatpush.msra.mxu0 0.0
  %901 = vmatpush.msra.mxu0 %v824
  %902 = vmatmul.f32.gmra.mxu0 %v812
  %v903 = vpop.f32.mrf.mxu0
  %v904 = vadd.f32 0.0, %v903
  %905 = vdwg.mxu0
  %v906 = vadd.f32 %v777, %v844
  %v907 = vadd.f32 %v778, %v864
  %v908 = vadd.f32 %v779, %v884
  %v909 = vadd.f32 %v780, %v904
  %910 = vrot.lane.b32.xlu0 %v19, 112
  %v911 = vpop.permute.xlu0 %910
  %912 = vrot.lane.b32.xlu0 %v20, 112
  %v913 = vpop.permute.xlu0 %912
  %914 = vrot.lane.b32.xlu0 %v25, 112
  %v915 = vpop.permute.xlu0 %914
  %916 = vrot.lane.b32.xlu0 %v26, 112
  %v917 = vpop.permute.xlu0 %916
  %vm918 = vcmp.lt.s32.totalorder %v30, 112
  %v919 = vsel %vm918, %v915, %v917
  %v920 = vsel %vm918, %v913, %v915
  %v921 = vsel %vm918, %v911, %v913
  %v922 = vsel %vm918, %v917, %v911
  %v923 = vsel %vm46, 1, 0
  %v924 = vsel %vm47, 1, 0
  %v925 = vsel %vm48, 1, 0
  %v926 = vsel %vm49, 1, 0
  %vm927 = vcmp.eq.s32.totalorder %v923, 1
  %vm928 = vcmp.eq.s32.totalorder %v924, 1
  %vm929 = vcmp.eq.s32.totalorder %v925, 1
  %vm930 = vcmp.eq.s32.totalorder %v926, 1
  %v931 = vsel %vm927, %v921, 0.0
  %v932 = vsel %vm928, %v920, 0.0
  %v933 = vsel %vm929, %v919, 0.0
  %v934 = vsel %vm930, %v922, 0.0
  %935 = vrot.lane.b32.xlu0 %v87, 100
  %v936 = vpop.permute.xlu0 %935
  %v937 = vsel %vm116, %v936, 0
  %v940 = vsel %vm119, %v931, 0
  %v943 = vsel %vm119, %v932, 0
  %v946 = vsel %vm119, %v933, 0
  %v949 = vsel %vm119, %v934, 0
  %951 = vmatpush.msra.mxu0 0.0
  %952 = vmatpush.msra.mxu0 0.0
  %953 = vmatpush.msra.mxu0 0.0
  %954 = vmatpush.msra.mxu0 0.0
  %955 = vmatpush.msra.mxu0 0.0
  %956 = vmatpush.msra.mxu0 0.0
  %957 = vmatpush.msra.mxu0 0.0
  %958 = vmatpush.msra.mxu0 0.0
  %959 = vmatpush.msra.mxu0 0.0
  %960 = vmatpush.msra.mxu0 0.0
  %961 = vmatpush.msra.mxu0 0.0
  %962 = vmatpush.msra.mxu0 0.0
  %963 = vmatpush.msra.mxu0 0.0
  %964 = vmatpush.msra.mxu0 0.0
  %965 = vmatpush.msra.mxu0 0.0
  %966 = vmatpush.msra.mxu0 %v940
  %967 = vmatmul.f32.gmra.mxu0 %v937
  %v968 = vpop.f32.mrf.mxu0
  %v969 = vadd.f32 0.0, %v968
  %970 = vdwg.mxu0
  %971 = vmatpush.msra.mxu0 0.0
  %972 = vmatpush.msra.mxu0 0.0
  %973 = vmatpush.msra.mxu0 0.0
  %974 = vmatpush.msra.mxu0 0.0
  %975 = vmatpush.msra.mxu0 0.0
  %976 = vmatpush.msra.mxu0 0.0
  %977 = vmatpush.msra.mxu0 0.0
  %978 = vmatpush.msra.mxu0 0.0
  %979 = vmatpush.msra.mxu0 0.0
  %980 = vmatpush.msra.mxu0 0.0
  %981 = vmatpush.msra.mxu0 0.0
  %982 = vmatpush.msra.mxu0 0.0
  %983 = vmatpush.msra.mxu0 0.0
  %984 = vmatpush.msra.mxu0 0.0
  %985 = vmatpush.msra.mxu0 0.0
  %986 = vmatpush.msra.mxu0 %v943
  %987 = vmatmul.f32.gmra.mxu0 %v937
  %v988 = vpop.f32.mrf.mxu0
  %v989 = vadd.f32 0.0, %v988
  %990 = vdwg.mxu0
  %991 = vmatpush.msra.mxu0 0.0
  %992 = vmatpush.msra.mxu0 0.0
  %993 = vmatpush.msra.mxu0 0.0
  %994 = vmatpush.msra.mxu0 0.0
  %995 = vmatpush.msra.mxu0 0.0
  %996 = vmatpush.msra.mxu0 0.0
  %997 = vmatpush.msra.mxu0 0.0
  %998 = vmatpush.msra.mxu0 0.0
  %999 = vmatpush.msra.mxu0 0.0
  %1000 = vmatpush.msra.mxu0 0.0
  %1001 = vmatpush.msra.mxu0 0.0
  %1002 = vmatpush.msra.mxu0 0.0
  %1003 = vmatpush.msra.mxu0 0.0
  %1004 = vmatpush.msra.mxu0 0.0
  %1005 = vmatpush.msra.mxu0 0.0
  %1006 = vmatpush.msra.mxu0 %v946
  %1007 = vmatmul.f32.gmra.mxu0 %v937
  %v1008 = vpop.f32.mrf.mxu0
  %v1009 = vadd.f32 0.0, %v1008
  %1010 = vdwg.mxu0
  %1011 = vmatpush.msra.mxu0 0.0
  %1012 = vmatpush.msra.mxu0 0.0
  %1013 = vmatpush.msra.mxu0 0.0
  %1014 = vmatpush.msra.mxu0 0.0
  %1015 = vmatpush.msra.mxu0 0.0
  %1016 = vmatpush.msra.mxu0 0.0
  %1017 = vmatpush.msra.mxu0 0.0
  %1018 = vmatpush.msra.mxu0 0.0
  %1019 = vmatpush.msra.mxu0 0.0
  %1020 = vmatpush.msra.mxu0 0.0
  %1021 = vmatpush.msra.mxu0 0.0
  %1022 = vmatpush.msra.mxu0 0.0
  %1023 = vmatpush.msra.mxu0 0.0
  %1024 = vmatpush.msra.mxu0 0.0
  %1025 = vmatpush.msra.mxu0 0.0
  %1026 = vmatpush.msra.mxu0 %v949
  %1027 = vmatmul.f32.gmra.mxu0 %v937
  %v1028 = vpop.f32.mrf.mxu0
  %v1029 = vadd.f32 0.0, %v1028
  %1030 = vdwg.mxu0
  %v1031 = vadd.f32 %v906, %v969
  %v1032 = vadd.f32 %v907, %v989
  %v1033 = vadd.f32 %v908, %v1009
  %v1034 = vadd.f32 %v909, %v1029
  %1035 = vrot.lane.b32.xlu0 %v19, 111
  %v1036 = vpop.permute.xlu0 %1035
  %1037 = vrot.lane.b32.xlu0 %v20, 111
  %v1038 = vpop.permute.xlu0 %1037
  %1039 = vrot.lane.b32.xlu0 %v25, 111
  %v1040 = vpop.permute.xlu0 %1039
  %1041 = vrot.lane.b32.xlu0 %v26, 111
  %v1042 = vpop.permute.xlu0 %1041
  %vm1043 = vcmp.lt.s32.totalorder %v30, 111
  %v1044 = vsel %vm1043, %v1040, %v1042
  %v1045 = vsel %vm1043, %v1038, %v1040
  %v1046 = vsel %vm1043, %v1036, %v1038
  %v1047 = vsel %vm1043, %v1042, %v1036
  %vm1048 = vmand %vm46, %vm54
  %vm1049 = vmand %vm47, %vm55
  %vm1050 = vmand %vm48, %vm56
  %vm1051 = vmand %vm49, %vm57
  %v1052 = vsel %vm1048, 1, 0
  %v1053 = vsel %vm1049, 1, 0
  %v1054 = vsel %vm1050, 1, 0
  %v1055 = vsel %vm1051, 1, 0
  %vm1056 = vcmp.eq.s32.totalorder %v1052, 1
  %vm1057 = vcmp.eq.s32.totalorder %v1053, 1
  %vm1058 = vcmp.eq.s32.totalorder %v1054, 1
  %vm1059 = vcmp.eq.s32.totalorder %v1055, 1
  %v1060 = vsel %vm1056, %v1046, 0.0
  %v1061 = vsel %vm1057, %v1045, 0.0
  %v1062 = vsel %vm1058, %v1044, 0.0
  %v1063 = vsel %vm1059, %v1047, 0.0
  %1064 = vrot.lane.b32.xlu0 %v87, 96
  %v1065 = vpop.permute.xlu0 %1064
  %v1066 = vsel %vm116, %v1065, 0
  %v1069 = vsel %vm119, %v1060, 0
  %v1072 = vsel %vm119, %v1061, 0
  %v1075 = vsel %vm119, %v1062, 0
  %v1078 = vsel %vm119, %v1063, 0
  %1080 = vmatpush.msra.mxu0 0.0
  %1081 = vmatpush.msra.mxu0 0.0
  %1082 = vmatpush.msra.mxu0 0.0
  %1083 = vmatpush.msra.mxu0 0.0
  %1084 = vmatpush.msra.mxu0 0.0
  %1085 = vmatpush.msra.mxu0 0.0
  %1086 = vmatpush.msra.mxu0 0.0
  %1087 = vmatpush.msra.mxu0 0.0
  %1088 = vmatpush.msra.mxu0 0.0
  %1089 = vmatpush.msra.mxu0 0.0
  %1090 = vmatpush.msra.mxu0 0.0
  %1091 = vmatpush.msra.mxu0 0.0
  %1092 = vmatpush.msra.mxu0 0.0
  %1093 = vmatpush.msra.mxu0 0.0
  %1094 = vmatpush.msra.mxu0 0.0
  %1095 = vmatpush.msra.mxu0 %v1069
  %1096 = vmatmul.f32.gmra.mxu0 %v1066
  %v1097 = vpop.f32.mrf.mxu0
  %v1098 = vadd.f32 0.0, %v1097
  %1099 = vdwg.mxu0
  %1100 = vmatpush.msra.mxu0 0.0
  %1101 = vmatpush.msra.mxu0 0.0
  %1102 = vmatpush.msra.mxu0 0.0
  %1103 = vmatpush.msra.mxu0 0.0
  %1104 = vmatpush.msra.mxu0 0.0
  %1105 = vmatpush.msra.mxu0 0.0
  %1106 = vmatpush.msra.mxu0 0.0
  %1107 = vmatpush.msra.mxu0 0.0
  %1108 = vmatpush.msra.mxu0 0.0
  %1109 = vmatpush.msra.mxu0 0.0
  %1110 = vmatpush.msra.mxu0 0.0
  %1111 = vmatpush.msra.mxu0 0.0
  %1112 = vmatpush.msra.mxu0 0.0
  %1113 = vmatpush.msra.mxu0 0.0
  %1114 = vmatpush.msra.mxu0 0.0
  %1115 = vmatpush.msra.mxu0 %v1072
  %1116 = vmatmul.f32.gmra.mxu0 %v1066
  %v1117 = vpop.f32.mrf.mxu0
  %v1118 = vadd.f32 0.0, %v1117
  %1119 = vdwg.mxu0
  %1120 = vmatpush.msra.mxu0 0.0
  %1121 = vmatpush.msra.mxu0 0.0
  %1122 = vmatpush.msra.mxu0 0.0
  %1123 = vmatpush.msra.mxu0 0.0
  %1124 = vmatpush.msra.mxu0 0.0
  %1125 = vmatpush.msra.mxu0 0.0
  %1126 = vmatpush.msra.mxu0 0.0
  %1127 = vmatpush.msra.mxu0 0.0
  %1128 = vmatpush.msra.mxu0 0.0
  %1129 = vmatpush.msra.mxu0 0.0
  %1130 = vmatpush.msra.mxu0 0.0
  %1131 = vmatpush.msra.mxu0 0.0
  %1132 = vmatpush.msra.mxu0 0.0
  %1133 = vmatpush.msra.mxu0 0.0
  %1134 = vmatpush.msra.mxu0 0.0
  %1135 = vmatpush.msra.mxu0 %v1075
  %1136 = vmatmul.f32.gmra.mxu0 %v1066
  %v1137 = vpop.f32.mrf.mxu0
  %v1138 = vadd.f32 0.0, %v1137
  %1139 = vdwg.mxu0
  %1140 = vmatpush.msra.mxu0 0.0
  %1141 = vmatpush.msra.mxu0 0.0
  %1142 = vmatpush.msra.mxu0 0.0
  %1143 = vmatpush.msra.mxu0 0.0
  %1144 = vmatpush.msra.mxu0 0.0
  %1145 = vmatpush.msra.mxu0 0.0
  %1146 = vmatpush.msra.mxu0 0.0
  %1147 = vmatpush.msra.mxu0 0.0
  %1148 = vmatpush.msra.mxu0 0.0
  %1149 = vmatpush.msra.mxu0 0.0
  %1150 = vmatpush.msra.mxu0 0.0
  %1151 = vmatpush.msra.mxu0 0.0
  %1152 = vmatpush.msra.mxu0 0.0
  %1153 = vmatpush.msra.mxu0 0.0
  %1154 = vmatpush.msra.mxu0 0.0
  %1155 = vmatpush.msra.mxu0 %v1078
  %1156 = vmatmul.f32.gmra.mxu0 %v1066
  %v1157 = vpop.f32.mrf.mxu0
  %v1158 = vadd.f32 0.0, %v1157
  %1159 = vdwg.mxu0
  %v1160 = vadd.f32 %v1031, %v1098
  %v1161 = vadd.f32 %v1032, %v1118
  %v1162 = vadd.f32 %v1033, %v1138
  %v1163 = vadd.f32 %v1034, %v1158
  %v1164 = vld [vmem:[%s2] sm:$0xf]
  %1166 = vset.pattern.permute.xlu0 0
  %1167 = vperm.xlu0 %1166, %v1164
  %v1168 = vpop.permute.xlu0 %1167
  %v1170 = vadd.f32 %v1160, %v1168
  %v1171 = vadd.f32 %v1161, %v1168
  %v1172 = vadd.f32 %v1162, %v1168
  %v1173 = vadd.f32 %v1163, %v1168
  %v1174 = vmax.f32 %v1170, 0.0
  %v1175 = vmax.f32 %v1171, 0.0
  %v1176 = vmax.f32 %v1172, 0.0
  %v1177 = vmax.f32 %v1173, 0.0
  %v1180 = vrot.slane %v1175, 4
  %v1181 = vsel %vm119, %v1174, %v1180
  %1183 = vst [vmem:[%s3] sm:$0xff] %v1181
  %v1186 = vrot.slane %v1177, 4
  %v1187 = vsel %vm119, %v1176, %v1186
  %s1189 = scalar_lea.vmem %s3, 8
  %1190 = vst [vmem:[%s1189] sm:$0xff] %v1187
  // Predicated region
  $region14: #{res_forward.1} parent=0 // pred_check
    _
  $region15: #{res_forward.1} parent=0 // pred_check_branch
    %1192 = sbr.rel (0) target = $region17
  $region16: #{res_forward.1} parent=0 // pred_region
    _
  $region17: #{res_forward.1} parent=0 // pred_fallthru
    _
  // Predicated region
  $region18: #{res_forward.1} parent=0 // pred_check
    _
  $region19: #{res_forward.1} parent=0 // pred_check_branch
    %1194 = sbr.rel (0) target = $region21
  $region20: #{res_forward.1} parent=0 // pred_region
    _
  $region21: #{res_forward.1} parent=0 // pred_fallthru
    _

</llo_original>
